<compile_context>
chip_gen: v6e
topology: v6e:2x2x1
jax: 0.10.0
libtpu: 0.0.40
codegen_flags: <defaults>
</compile_context>

<pallas_src>
import functools

import jax
import jax.numpy as jnp
from jax.experimental import pallas as pl
from jax.experimental.pallas import tpu as pltpu


def _activation(v, kind: str, clipping_value: float):
    # create_act(): 'relu' -> ReLU, anything else -> Hardtanh(0.0, clipping_value).
    if kind == "relu":
        return jnp.maximum(v, 0.0)
    return jnp.clip(v, 0.0, clipping_value)


def _tc_residual_block_kernel(
    x_ref,     # (nb, C, L)      unpadded input block (nb batch elements per grid step)
    w1_ref,    # (C, K*C)        conv1 weight, taps folded into the contraction dim (compute dtype)
    s1_ref,    # (C, 1)          BN1 scale  (gamma / sqrt(var + eps)), f32
    b1_ref,    # (C, 1)          BN1 shift  (beta - mean * scale), f32
    w2_ref,    # (C, K*C)        conv2 weight (compute dtype)
    s2_ref,    # (C, 1)          BN2 scale, f32
    b2_ref,    # (C, 1)          BN2 shift, f32
    o_ref,     # (nb, C, L)      output block
    *,
    ksize: int,
    dilation: int,
    pad: int,
    nb: int,
    length: int,
    inner_act: str,
    clipping_value: float,
    comb_type: str,
    compute_dtype,
):
    c = o_ref.shape[1]
    L = length

    w1 = w1_ref[...]
    w2 = w2_ref[...]
    s1 = s1_ref[...]
    b1 = b1_ref[...]
    s2 = s2_ref[...]
    b2 = b2_ref[...]

    def tap_stack(z):
        # z: (C, L) f32.  Returns the (K*C, L) tap-stacked operand for one fused K*C-deep
        # contraction.  'same' padding is value-level zero columns + static lane slices:
        # no VMEM scratch round trip, no HBM pre-pad; the lane shifts run on the XLU slot.
        if pad > 0:
            zpad = jnp.zeros((c, pad), jnp.float32)
            zp = jnp.concatenate([zpad, z, zpad], axis=1)        # (C, L + 2*pad)
        else:
            zp = z
        taps = [zp[:, k * dilation:k * dilation + L] for k in range(ksize)]
        return jnp.concatenate(taps, axis=0) if ksize > 1 else taps[0]

    # nb is small (bounded by the wrapper's VMEM/vreg budget) => static unroll is fine.
    for b in range(nb):
        x_b = x_ref[b].astype(jnp.float32)                       # (C, L) residual, read once

        # ---- conv1 ("same", stride=1, bias=False) + BN1 + inner activation ----
        t1 = tap_stack(x_b).astype(compute_dtype)
        acc1 = jnp.dot(w1, t1, preferred_element_type=jnp.float32)
        h = _activation(acc1 * s1 + b1, inner_act, clipping_value)

        # ---- conv2 ("same", stride=1, bias=False) + BN2 + inner activation ----
        t2 = tap_stack(h).astype(compute_dtype)
        acc2 = jnp.dot(w2, t2, preferred_element_type=jnp.float32)
        y = _activation(acc2 * s2 + b2, inner_act, clipping_value)

        # ---- residual combine (conv_type != 'SNN') + final activation ----
        if comb_type == "SUB":
            comb = y - x_b
        elif comb_type == "MUL":
            comb = y * x_b
        else:                                    # 'ADD' and the PyTorch fallback branch
            comb = y + x_b
        # self.act is always Hardtanh(0, clipping_value) -- see module-level note above.
        o_ref[b] = jnp.clip(comb, 0.0, clipping_value).astype(o_ref.dtype)


def _fold_bn(gamma, beta, running_mean, running_var, eps=1e-5):
    scale = gamma / jnp.sqrt(running_var + eps)
    shift = beta - running_mean * scale
    return (scale.reshape(-1, 1).astype(jnp.float32),
            shift.reshape(-1, 1).astype(jnp.float32))


def _pick_batch_block(n, c, l, bytes_budget=2 << 20):
    """Largest divisor of n whose rough per-step footprint fits the budget."""
    per_batch = c * l * 4 * 12   # x + two f32 accumulators + tap stacks + output (rough)
    cap = max(1, bytes_budget // max(per_batch, 1))
    nb = 1
    for d in range(1, n + 1):
        if n % d == 0 and d <= cap:
            nb = d
    return nb


def tc_residual_block_forward(
    x, w1, bn1, w2, bn2, *,
    size, stride=1, dilation=1, clipping_value=6.0, act="relu", comb_type="ADD",
    compute_dtype=jnp.bfloat16,
):
    """TCResidualBlock.forward, conv_type='NN', bottleneck=False, small=False, eval-mode BN.

    x        : (N, C, L)  NCL layout (same as the PyTorch module)
    w1, w2   : (C, C, K)  Conv1d weights (out_ch, in_ch, k), bias=False
    bn1, bn2 : (gamma, beta, running_mean, running_var), each shape (C,)
    """
    n, c, l = x.shape
    k = int(size)
    assert stride == 1, "Pallas path implements the stride==1 (no downsample) branch"
    # TODO(synk): stride > 1 requires the 1x1-conv downsample branch (build1DConvolution
    # internals are not part of the provided spec).
    assert k % 2 == 1, "odd kernel size required for 'same' padding (size // 2)"
    assert w1.shape == (c, c, k) and w2.shape == (c, c, k)

    pad = int(dilation) * (k // 2)

    # Fold the K taps into the contraction dim so each conv is a single K*C-deep MXU dot:
    # W2d[co, kk*C + ci] == W[co, ci, kk].  bf16 operands by default, f32 accumulation in-kernel.
    w1_2d = jnp.transpose(w1, (0, 2, 1)).reshape(c, k * c).astype(compute_dtype)
    w2_2d = jnp.transpose(w2, (0, 2, 1)).reshape(c, k * c).astype(compute_dtype)
    s1, b1 = _fold_bn(*bn1)
    s2, b2 = _fold_bn(*bn2)

    nb = _pick_batch_block(n, c, l)

    kernel = functools.partial(
        _tc_residual_block_kernel,
        ksize=k, dilation=int(dilation), pad=pad, nb=int(nb), length=int(l),
        inner_act=str(act), clipping_value=float(clipping_value),
        comb_type=str(comb_type), compute_dtype=compute_dtype,
    )

    resident = lambda i: (0, 0)      # weights / folded BN params: same block every grid step

    return pl.pallas_call(
        kernel,
        out_shape=jax.ShapeDtypeStruct((n, c, l), x.dtype),
        grid_spec=pltpu.PrefetchScalarGridSpec(
            num_scalar_prefetch=0,
            grid=(n // nb,),
            in_specs=[
                pl.BlockSpec((nb, c, l), lambda i: (i, 0, 0)),
                pl.BlockSpec((c, k * c), resident),
                pl.BlockSpec((c, 1), resident),
                pl.BlockSpec((c, 1), resident),
                pl.BlockSpec((c, k * c), resident),
                pl.BlockSpec((c, 1), resident),
                pl.BlockSpec((c, 1), resident),
            ],
            out_specs=pl.BlockSpec((nb, c, l), lambda i: (i, 0, 0)),
        ),
        compiler_params=pltpu.CompilerParams(
            dimension_semantics=("parallel",),
            # Per-step footprint is bounded by the nb picker, so 48 MiB is safe on v7x (64 MiB
            # physical) while leaving pipelining headroom on v5e/v6e (128 MiB physical).
            vmem_limit_bytes=48 * 1024 * 1024,
        ),
    )(x, w1_2d, s1, b1, w2_2d, s2, b2)


if __name__ == "__main__":
    # Small config consistent with the module: batch=2, channels=4, length=16, kernel size 3.
    N, C, L, K = 2, 4, 16, 3
    DILATION = 1
    CLIP = 6.0

    key = jax.random.PRNGKey(0)
    ks = jax.random.split(key, 11)
    x = jax.random.normal(ks[0], (N, C, L), dtype=jnp.float32)
    w1 = 0.3 * jax.random.normal(ks[1], (C, C, K), dtype=jnp.float32)
    w2 = 0.3 * jax.random.normal(ks[2], (C, C, K), dtype=jnp.float32)
    bn1 = (1.0 + 0.1 * jax.random.normal(ks[3], (C,)),
           0.1 * jax.random.normal(ks[4], (C,)),
           0.05 * jax.random.normal(ks[5], (C,)),
           1.0 + 0.1 * jnp.abs(jax.random.normal(ks[6], (C,))))
    bn2 = (1.0 + 0.1 * jax.random.normal(ks[7], (C,)),
           0.1 * jax.random.normal(ks[8], (C,)),
           0.05 * jax.random.normal(ks[9], (C,)),
           1.0 + 0.1 * jnp.abs(jax.random.normal(ks[10], (C,))))

    # ---- pure-JAX reference (exact elementwise mirror of the PyTorch forward) ----
    pad = DILATION * (K // 2)

    def conv1d_ref(inp, w):
        xp = jnp.pad(inp, ((0, 0), (0, 0), (pad, pad)))
        taps = jnp.stack(
            [xp[:, :, kk * DILATION: kk * DILATION + L] for kk in range(K)], axis=-1
        )                                                       # (N, C_in, L, K)
        return jnp.sum(taps[:, None] * w[None, :, :, None, :], axis=(2, 4))

    def bn_ref(inp, p, eps=1e-5):
        g, b, m, v = p
        return ((inp - m[None, :, None]) / jnp.sqrt(v[None, :, None] + eps)
                * g[None, :, None] + b[None, :, None])

    h_ref = jnp.maximum(bn_ref(conv1d_ref(x, w1), bn1), 0.0)        # inner act: ReLU
    y_ref = jnp.maximum(bn_ref(conv1d_ref(h_ref, w2), bn2), 0.0)
    ref = jnp.clip(y_ref + x, 0.0, CLIP)                            # final act: Hardtanh(0, clip)

    # f32 operands: tight check of the kernel structure.
    out_f32 = tc_residual_block_forward(
        x, w1, bn1, w2, bn2,
        size=K, stride=1, dilation=DILATION, clipping_value=CLIP,
        act="relu", comb_type="ADD", compute_dtype=jnp.float32,
    )
    # bf16 MXU operands (default production path): looser tolerance.
    out_bf16 = tc_residual_block_forward(
        x, w1, bn1, w2, bn2,
        size=K, stride=1, dilation=DILATION, clipping_value=CLIP,
        act="relu", comb_type="ADD", compute_dtype=jnp.bfloat16,
    )
    out_f32, out_bf16 = jax.block_until_ready((out_f32, out_bf16))

    assert out_f32.shape == (N, C, L), out_f32.shape
    assert out_f32.dtype == x.dtype, out_f32.dtype
    assert jnp.allclose(out_f32, ref, atol=1e-3, rtol=1e-3), \
        float(jnp.max(jnp.abs(out_f32 - ref)))
    assert jnp.allclose(out_bf16, ref, atol=3e-2, rtol=3e-2), \
        float(jnp.max(jnp.abs(out_bf16 - ref)))

    print("KERNEL_OK")
</pallas_src>

<mosaic_0001>
module attributes {stable_mosaic.version = 11 : i64} {
  func.func @_tc_residual_block_kernel(%arg0: i32, %arg1: memref<2x4x16xf32, #tpu.memory_space<vmem>>, %arg2: memref<4x12xf32, #tpu.memory_space<vmem>>, %arg3: memref<4x1xf32, #tpu.memory_space<vmem>>, %arg4: memref<4x1xf32, #tpu.memory_space<vmem>>, %arg5: memref<4x12xf32, #tpu.memory_space<vmem>>, %arg6: memref<4x1xf32, #tpu.memory_space<vmem>>, %arg7: memref<4x1xf32, #tpu.memory_space<vmem>>, %arg8: memref<2x4x16xf32, #tpu.memory_space<vmem>>) attributes {dimension_semantics = [#tpu.dimension_semantics<parallel>], iteration_bounds = array<i64: 1>, scalar_prefetch = 0 : i64, scratch_operands = 0 : i64, tpu.core_type = #tpu.core_type<tc>, window_params = [{transform_indices = @transform_0, window_bounds = array<i64: 2, 4, 16>}, {pipeline_mode = #tpu.pipeline_mode<synchronous>, transform_indices = @transform_1, window_bounds = array<i64: 4, 12>}, {pipeline_mode = #tpu.pipeline_mode<synchronous>, transform_indices = @transform_2, window_bounds = array<i64: 4, 1>}, {pipeline_mode = #tpu.pipeline_mode<synchronous>, transform_indices = @transform_3, window_bounds = array<i64: 4, 1>}, {pipeline_mode = #tpu.pipeline_mode<synchronous>, transform_indices = @transform_4, window_bounds = array<i64: 4, 12>}, {pipeline_mode = #tpu.pipeline_mode<synchronous>, transform_indices = @transform_5, window_bounds = array<i64: 4, 1>}, {pipeline_mode = #tpu.pipeline_mode<synchronous>, transform_indices = @transform_6, window_bounds = array<i64: 4, 1>}, {transform_indices = @transform_7, window_bounds = array<i64: 2, 4, 16>}]} {
    %c0 = arith.constant 0 : index
    %c0_0 = arith.constant 0 : index
    %0 = vector.load %arg2[%c0, %c0_0] : memref<4x12xf32, #tpu.memory_space<vmem>>, vector<4x12xf32>
    %c0_1 = arith.constant 0 : index
    %c0_2 = arith.constant 0 : index
    %1 = vector.load %arg5[%c0_1, %c0_2] : memref<4x12xf32, #tpu.memory_space<vmem>>, vector<4x12xf32>
    %c0_3 = arith.constant 0 : index
    %c0_4 = arith.constant 0 : index
    %2 = vector.load %arg3[%c0_3, %c0_4] : memref<4x1xf32, #tpu.memory_space<vmem>>, vector<4x1xf32>
    %c0_5 = arith.constant 0 : index
    %c0_6 = arith.constant 0 : index
    %3 = vector.load %arg4[%c0_5, %c0_6] : memref<4x1xf32, #tpu.memory_space<vmem>>, vector<4x1xf32>
    %c0_7 = arith.constant 0 : index
    %c0_8 = arith.constant 0 : index
    %4 = vector.load %arg6[%c0_7, %c0_8] : memref<4x1xf32, #tpu.memory_space<vmem>>, vector<4x1xf32>
    %c0_9 = arith.constant 0 : index
    %c0_10 = arith.constant 0 : index
    %5 = vector.load %arg7[%c0_9, %c0_10] : memref<4x1xf32, #tpu.memory_space<vmem>>, vector<4x1xf32>
    %c0_11 = arith.constant 0 : index
    %c0_12 = arith.constant 0 : index
    %c0_13 = arith.constant 0 : index
    %6 = vector.load %arg1[%c0_11, %c0_12, %c0_13] : memref<2x4x16xf32, #tpu.memory_space<vmem>>, vector<1x4x16xf32>
    %7 = vector.shape_cast %6 : vector<1x4x16xf32> to vector<4x16xf32>
    %cst = arith.constant 0.000000e+00 : f32
    %8 = vector.broadcast %cst : f32 to vector<4x1xf32>
    %9 = tpu.concatenate %8, %7, %8 in 1 : vector<4x1xf32>, vector<4x16xf32>, vector<4x1xf32> -> vector<4x18xf32>
    %10 = vector.extract_strided_slice %9 {offsets = [0, 0], sizes = [4, 16], strides = [1, 1]} : vector<4x18xf32> to vector<4x16xf32>
    %11 = vector.extract_strided_slice %9 {offsets = [0, 1], sizes = [4, 16], strides = [1, 1]} : vector<4x18xf32> to vector<4x16xf32>
    %12 = vector.extract_strided_slice %9 {offsets = [0, 2], sizes = [4, 16], strides = [1, 1]} : vector<4x18xf32> to vector<4x16xf32>
    %13 = tpu.concatenate %10, %11, %12 in 0 : vector<4x16xf32>, vector<4x16xf32>, vector<4x16xf32> -> vector<12x16xf32>
    %cst_14 = arith.constant dense<0.000000e+00> : vector<4x16xf32>
    %14 = tpu.matmul %0, %13, %cst_14 {dimension_numbers = #tpu.dot_dimension_numbers<[1], [0], [0], [1], [0, 0, 1, 1], [], []>} : vector<4x12xf32>, vector<12x16xf32>, vector<4x16xf32> -> vector<4x16xf32>
    %15 = vector.broadcast %2 : vector<4x1xf32> to vector<4x16xf32>
    %16 = arith.mulf %14, %15 : vector<4x16xf32>
    %17 = vector.broadcast %3 : vector<4x1xf32> to vector<4x16xf32>
    %18 = arith.addf %16, %17 : vector<4x16xf32>
    %cst_15 = arith.constant 0.000000e+00 : f32
    %19 = vector.broadcast %cst_15 : f32 to vector<4x16xf32>
    %20 = arith.maximumf %18, %19 : vector<4x16xf32>
    %cst_16 = arith.constant 0.000000e+00 : f32
    %21 = vector.broadcast %cst_16 : f32 to vector<4x1xf32>
    %22 = tpu.concatenate %21, %20, %21 in 1 : vector<4x1xf32>, vector<4x16xf32>, vector<4x1xf32> -> vector<4x18xf32>
    %23 = vector.extract_strided_slice %22 {offsets = [0, 0], sizes = [4, 16], strides = [1, 1]} : vector<4x18xf32> to vector<4x16xf32>
    %24 = vector.extract_strided_slice %22 {offsets = [0, 1], sizes = [4, 16], strides = [1, 1]} : vector<4x18xf32> to vector<4x16xf32>
    %25 = vector.extract_strided_slice %22 {offsets = [0, 2], sizes = [4, 16], strides = [1, 1]} : vector<4x18xf32> to vector<4x16xf32>
    %26 = tpu.concatenate %23, %24, %25 in 0 : vector<4x16xf32>, vector<4x16xf32>, vector<4x16xf32> -> vector<12x16xf32>
    %cst_17 = arith.constant dense<0.000000e+00> : vector<4x16xf32>
    %27 = tpu.matmul %1, %26, %cst_17 {dimension_numbers = #tpu.dot_dimension_numbers<[1], [0], [0], [1], [0, 0, 1, 1], [], []>} : vector<4x12xf32>, vector<12x16xf32>, vector<4x16xf32> -> vector<4x16xf32>
    %28 = vector.broadcast %4 : vector<4x1xf32> to vector<4x16xf32>
    %29 = arith.mulf %27, %28 : vector<4x16xf32>
    %30 = vector.broadcast %5 : vector<4x1xf32> to vector<4x16xf32>
    %31 = arith.addf %29, %30 : vector<4x16xf32>
    %cst_18 = arith.constant 0.000000e+00 : f32
    %32 = vector.broadcast %cst_18 : f32 to vector<4x16xf32>
    %33 = arith.maximumf %31, %32 : vector<4x16xf32>
    %34 = arith.addf %33, %7 : vector<4x16xf32>
    %cst_19 = arith.constant 0.000000e+00 : f32
    %cst_20 = arith.constant 6.000000e+00 : f32
    %35 = vector.broadcast %cst_19 : f32 to vector<4x16xf32>
    %36 = arith.maximumf %35, %34 : vector<4x16xf32>
    %37 = vector.broadcast %cst_20 : f32 to vector<4x16xf32>
    %38 = arith.minimumf %37, %36 : vector<4x16xf32>
    %c0_21 = arith.constant 0 : index
    %c0_22 = arith.constant 0 : index
    %c0_23 = arith.constant 0 : index
    %39 = vector.load %arg8[%c0_21, %c0_22, %c0_23] : memref<2x4x16xf32, #tpu.memory_space<vmem>>, vector<1x4x16xf32>
    %40 = vector.shape_cast %39 : vector<1x4x16xf32> to vector<4x16xf32>
    %41 = vector.shape_cast %38 : vector<4x16xf32> to vector<1x4x16xf32>
    tpu.vector_store %arg8[%c0_21, %c0_22, %c0_23], %41 {strides = array<i32>} : memref<2x4x16xf32, #tpu.memory_space<vmem>>, vector<1x4x16xf32>,
    %c1 = arith.constant 1 : index
    %c0_24 = arith.constant 0 : index
    %c0_25 = arith.constant 0 : index
    %42 = vector.load %arg1[%c1, %c0_24, %c0_25] : memref<2x4x16xf32, #tpu.memory_space<vmem>>, vector<1x4x16xf32>
    %43 = vector.shape_cast %42 : vector<1x4x16xf32> to vector<4x16xf32>
    %cst_26 = arith.constant 0.000000e+00 : f32
    %44 = vector.broadcast %cst_26 : f32 to vector<4x1xf32>
    %45 = tpu.concatenate %44, %43, %44 in 1 : vector<4x1xf32>, vector<4x16xf32>, vector<4x1xf32> -> vector<4x18xf32>
    %46 = vector.extract_strided_slice %45 {offsets = [0, 0], sizes = [4, 16], strides = [1, 1]} : vector<4x18xf32> to vector<4x16xf32>
    %47 = vector.extract_strided_slice %45 {offsets = [0, 1], sizes = [4, 16], strides = [1, 1]} : vector<4x18xf32> to vector<4x16xf32>
    %48 = vector.extract_strided_slice %45 {offsets = [0, 2], sizes = [4, 16], strides = [1, 1]} : vector<4x18xf32> to vector<4x16xf32>
    %49 = tpu.concatenate %46, %47, %48 in 0 : vector<4x16xf32>, vector<4x16xf32>, vector<4x16xf32> -> vector<12x16xf32>
    %cst_27 = arith.constant dense<0.000000e+00> : vector<4x16xf32>
    %50 = tpu.matmul %0, %49, %cst_27 {dimension_numbers = #tpu.dot_dimension_numbers<[1], [0], [0], [1], [0, 0, 1, 1], [], []>} : vector<4x12xf32>, vector<12x16xf32>, vector<4x16xf32> -> vector<4x16xf32>
    %51 = vector.broadcast %2 : vector<4x1xf32> to vector<4x16xf32>
    %52 = arith.mulf %50, %51 : vector<4x16xf32>
    %53 = vector.broadcast %3 : vector<4x1xf32> to vector<4x16xf32>
    %54 = arith.addf %52, %53 : vector<4x16xf32>
    %cst_28 = arith.constant 0.000000e+00 : f32
    %55 = vector.broadcast %cst_28 : f32 to vector<4x16xf32>
    %56 = arith.maximumf %54, %55 : vector<4x16xf32>
    %cst_29 = arith.constant 0.000000e+00 : f32
    %57 = vector.broadcast %cst_29 : f32 to vector<4x1xf32>
    %58 = tpu.concatenate %57, %56, %57 in 1 : vector<4x1xf32>, vector<4x16xf32>, vector<4x1xf32> -> vector<4x18xf32>
    %59 = vector.extract_strided_slice %58 {offsets = [0, 0], sizes = [4, 16], strides = [1, 1]} : vector<4x18xf32> to vector<4x16xf32>
    %60 = vector.extract_strided_slice %58 {offsets = [0, 1], sizes = [4, 16], strides = [1, 1]} : vector<4x18xf32> to vector<4x16xf32>
    %61 = vector.extract_strided_slice %58 {offsets = [0, 2], sizes = [4, 16], strides = [1, 1]} : vector<4x18xf32> to vector<4x16xf32>
    %62 = tpu.concatenate %59, %60, %61 in 0 : vector<4x16xf32>, vector<4x16xf32>, vector<4x16xf32> -> vector<12x16xf32>
    %cst_30 = arith.constant dense<0.000000e+00> : vector<4x16xf32>
    %63 = tpu.matmul %1, %62, %cst_30 {dimension_numbers = #tpu.dot_dimension_numbers<[1], [0], [0], [1], [0, 0, 1, 1], [], []>} : vector<4x12xf32>, vector<12x16xf32>, vector<4x16xf32> -> vector<4x16xf32>
    %64 = vector.broadcast %4 : vector<4x1xf32> to vector<4x16xf32>
    %65 = arith.mulf %63, %64 : vector<4x16xf32>
    %66 = vector.broadcast %5 : vector<4x1xf32> to vector<4x16xf32>
    %67 = arith.addf %65, %66 : vector<4x16xf32>
    %cst_31 = arith.constant 0.000000e+00 : f32
    %68 = vector.broadcast %cst_31 : f32 to vector<4x16xf32>
    %69 = arith.maximumf %67, %68 : vector<4x16xf32>
    %70 = arith.addf %69, %43 : vector<4x16xf32>
    %cst_32 = arith.constant 0.000000e+00 : f32
    %cst_33 = arith.constant 6.000000e+00 : f32
    %71 = vector.broadcast %cst_32 : f32 to vector<4x16xf32>
    %72 = arith.maximumf %71, %70 : vector<4x16xf32>
    %73 = vector.broadcast %cst_33 : f32 to vector<4x16xf32>
    %74 = arith.minimumf %73, %72 : vector<4x16xf32>
    %c1_34 = arith.constant 1 : index
    %c0_35 = arith.constant 0 : index
    %c0_36 = arith.constant 0 : index
    %75 = vector.load %arg8[%c1_34, %c0_35, %c0_36] : memref<2x4x16xf32, #tpu.memory_space<vmem>>, vector<1x4x16xf32>
    %76 = vector.shape_cast %75 : vector<1x4x16xf32> to vector<4x16xf32>
    %77 = vector.shape_cast %74 : vector<4x16xf32> to vector<1x4x16xf32>
    tpu.vector_store %arg8[%c1_34, %c0_35, %c0_36], %77 {strides = array<i32>} : memref<2x4x16xf32, #tpu.memory_space<vmem>>, vector<1x4x16xf32>,
    return
  }
  func.func @transform_0(%arg0: i32) -> (i32, i32, i32) {
    %c0_i32 = arith.constant 0 : i32
    %c0_i32_0 = arith.constant 0 : i32
    %c0_i32_1 = arith.constant 0 : i32
    return %arg0, %c0_i32, %c0_i32_0 : i32, i32, i32
  }
  func.func @transform_1(%arg0: i32) -> (i32, i32) {
    %c0_i32 = arith.constant 0 : i32
    %c0_i32_0 = arith.constant 0 : i32
    %c0_i32_1 = arith.constant 0 : i32
    return %c0_i32, %c0_i32_0 : i32, i32
  }
  func.func @transform_2(%arg0: i32) -> (i32, i32) {
    %c0_i32 = arith.constant 0 : i32
    %c0_i32_0 = arith.constant 0 : i32
    %c0_i32_1 = arith.constant 0 : i32
    return %c0_i32, %c0_i32_0 : i32, i32
  }
  func.func @transform_3(%arg0: i32) -> (i32, i32) {
    %c0_i32 = arith.constant 0 : i32
    %c0_i32_0 = arith.constant 0 : i32
    %c0_i32_1 = arith.constant 0 : i32
    return %c0_i32, %c0_i32_0 : i32, i32
  }
  func.func @transform_4(%arg0: i32) -> (i32, i32) {
    %c0_i32 = arith.constant 0 : i32
    %c0_i32_0 = arith.constant 0 : i32
    %c0_i32_1 = arith.constant 0 : i32
    return %c0_i32, %c0_i32_0 : i32, i32
  }
  func.func @transform_5(%arg0: i32) -> (i32, i32) {
    %c0_i32 = arith.constant 0 : i32
    %c0_i32_0 = arith.constant 0 : i32
    %c0_i32_1 = arith.constant 0 : i32
    return %c0_i32, %c0_i32_0 : i32, i32
  }
  func.func @transform_6(%arg0: i32) -> (i32, i32) {
    %c0_i32 = arith.constant 0 : i32
    %c0_i32_0 = arith.constant 0 : i32
    %c0_i32_1 = arith.constant 0 : i32
    return %c0_i32, %c0_i32_0 : i32, i32
  }
  func.func @transform_7(%arg0: i32) -> (i32, i32, i32) {
    %c0_i32 = arith.constant 0 : i32
    %c0_i32_0 = arith.constant 0 : i32
    %c0_i32_1 = arith.constant 0 : i32
    return %arg0, %c0_i32, %c0_i32_0 : i32, i32, i32
  }
}

</mosaic_0001>

<llo_original>
// kernel: tpu_custom_call.1
$region0: #{tpu_custom_call.1}
  #allocation0 [shape = 'u32[]', space=smem, size = 0x4, offset = 0x4, fixed_abs, tag = 'smem constant byte address 0x4 - core index']
  #allocation1 [shape = 'u32[144,128]{1,0:T(1,128)}', space=vmem, size = 0x12000, scoped, tag = 'internal scratch']
  %s0 = inlined_call_operand.vmem [shape: f32[2,4,16], index: 0, kind: input, shape index: {}]
  %s1 = inlined_call_operand.vmem [shape: f32[4,12], index: 1, kind: input, shape index: {}]
  %s2 = inlined_call_operand.vmem [shape: f32[4,1], index: 2, kind: input, shape index: {}]
  %s3 = inlined_call_operand.vmem [shape: f32[4,1], index: 3, kind: input, shape index: {}]
  %s4 = inlined_call_operand.vmem [shape: f32[4,12], index: 4, kind: input, shape index: {}]
  %s5 = inlined_call_operand.vmem [shape: f32[4,1], index: 5, kind: input, shape index: {}]
  %s6 = inlined_call_operand.vmem [shape: f32[4,1], index: 6, kind: input, shape index: {}]
  %s7 = inlined_call_operand.hbm [shape: f32[2,4,16], index: 7, kind: output, shape index: {}]
  %s8 = sld [smem:[#allocation0]]
  $region38: #{tpu_custom_call.1} parent=0
    _
  %s10 = ssub.s32 1, %s8
  %s11 = scalar_select 0, %s10, %s8
  $region1: #{tpu_custom_call.1} parent=0
    #allocation2 [shape = 'u8[4096]{0}', space=vmem, size = 0x1000, scoped, tag = 'output window, operand 0, single buffered']
    #allocation3 [shape = 's32[1]{0}', space=sflag, size = 0x4, scoped, tag = 'scoped memory for tpu_custom_call.1']
    %12 = vsyncpa [#allocation3], 0
    // Predicated region
    $region2: #{tpu_custom_call.1} parent=1 // pred_check
      _
    $region3: #{tpu_custom_call.1} parent=1 // pred_check_branch
      %14 = sbr.rel (0) target = $region5
    $region4: #{tpu_custom_call.1} parent=1 // pred_region
      _
    $region5: #{tpu_custom_call.1} parent=1 // pred_fallthru
      _
    // Predicated region
    $region6: #{tpu_custom_call.1} parent=1 // pred_check
      _
    $region7: #{tpu_custom_call.1} parent=1 // pred_check_branch
      %16 = sbr.rel (0) target = $region9
    $region8: #{tpu_custom_call.1} parent=1 // pred_region
      _
    $region9: #{tpu_custom_call.1} parent=1 // pred_fallthru
      _
    // Predicated region
    $region10: #{tpu_custom_call.1} parent=1 // pred_check
      _
    $region11: #{tpu_custom_call.1} parent=1 // pred_check_branch
      %18 = sbr.rel (0) target = $region13
    $region12: #{tpu_custom_call.1} parent=1 // pred_region
      _
    $region13: #{tpu_custom_call.1} parent=1 // pred_fallthru
      _
    // Predicated region
    $region14: #{tpu_custom_call.1} parent=1 // pred_check
      _
    $region15: #{tpu_custom_call.1} parent=1 // pred_check_branch
      %20 = sbr.rel (0) target = $region17
    $region16: #{tpu_custom_call.1} parent=1 // pred_region
      _
    $region17: #{tpu_custom_call.1} parent=1 // pred_fallthru
      _
    // Predicated region
    $region18: #{tpu_custom_call.1} parent=1 // pred_check
      _
    $region19: #{tpu_custom_call.1} parent=1 // pred_check_branch
      %22 = sbr.rel (0) target = $region21
    $region20: #{tpu_custom_call.1} parent=1 // pred_region
      _
    $region21: #{tpu_custom_call.1} parent=1 // pred_fallthru
      _
    // Predicated region
    $region22: #{tpu_custom_call.1} parent=1 // pred_check
      _
    $region23: #{tpu_custom_call.1} parent=1 // pred_check_branch
      %24 = sbr.rel (0) target = $region25
    $region24: #{tpu_custom_call.1} parent=1 // pred_region
      _
    $region25: #{tpu_custom_call.1} parent=1 // pred_fallthru
      _
    // Predicated region
    $region26: #{tpu_custom_call.1} parent=1 // pred_check
      _
    $region27: #{tpu_custom_call.1} parent=1 // pred_check_branch
      %26 = sbr.rel (0) target = $region29
    $region28: #{tpu_custom_call.1} parent=1 // pred_region
      _
    $region29: #{tpu_custom_call.1} parent=1 // pred_fallthru
      _
    %v27 = vld [vmem:[%s1] sm:$0xf]
    %v28 = vld [vmem:[%s4] sm:$0xf]
    %v29 = vld [vmem:[%s2] sm:$0xf]
    %v30 = vld [vmem:[%s3] sm:$0xf]
    %v31 = vld [vmem:[%s5] sm:$0xf]
    %v32 = vld [vmem:[%s6] sm:$0xf]
    %v33 = vld [vmem:[%s0] sm:$0xf]
    %35 = vrot.lane.b32.xlu0 %v33, 1
    %v36 = vpop.permute.xlu0 %35
    %vm38 = vcmask 7168
    %v39 = vsel %vm38, 0.0, %v36
    %vm40 = vcmask 138240
    %v41 = vsel %vm40, %v39, 0.0
    %v43 = vrot.slane %v41, 4
    %44 = vrot.lane.b32.xlu0 %v43, 127
    %v45 = vpop.permute.xlu0 %44
    %47 = vrot.lane.b32.xlu0 %v41, 126
    %v48 = vpop.permute.xlu0 %47
    %vm49 = vcmask 1043456
    %v50 = vsel %vm49, %v41, %v45
    %vm51 = vcmask 97280
    %v53 = vsel %vm51, %v27, 0
    %v55 = vsel %vm49, %v48, 0
    %57 = vmatprep.subr.mxu0 0.0
    %58 = vmatpush1.msra.mxu0 0.0
    %59 = vmatprep.subr.mxu0 0.0
    %60 = vmatpush1.msra.mxu0 0.0
    %61 = vmatprep.subr.mxu0 0.0
    %62 = vmatpush1.msra.mxu0 0.0
    %63 = vmatprep.subr.mxu0 0.0
    %64 = vmatpush1.msra.mxu0 0.0
    %65 = vmatprep.subr.mxu0 0.0
    %66 = vmatpush1.msra.mxu0 0.0
    %67 = vmatprep.subr.mxu0 0.0
    %68 = vmatpush1.msra.mxu0 0.0
    %69 = vmatprep.subr.mxu0 0.0
    %70 = vmatpush1.msra.mxu0 0.0
    %71 = vmatprep.subr.mxu0 0.0
    %72 = vmatpush1.msra.mxu0 0.0
    %73 = vmatprep.subr.mxu0 0.0
    %74 = vmatpush1.msra.mxu0 0.0
    %75 = vmatprep.subr.mxu0 0.0
    %76 = vmatpush1.msra.mxu0 0.0
    %77 = vmatprep.subr.mxu0 0.0
    %78 = vmatpush1.msra.mxu0 0.0
    %79 = vmatprep.subr.mxu0 0.0
    %80 = vmatpush1.msra.mxu0 0.0
    %81 = vmatprep.subr.mxu0 0.0
    %82 = vmatpush1.msra.mxu0 0.0
    %83 = vmatprep.subr.mxu0 0.0
    %84 = vmatpush1.msra.mxu0 0.0
    %85 = vmatprep.subr.mxu0 0.0
    %86 = vmatpush1.msra.mxu0 %v55
    %87 = vmatprep.subr.mxu0 0.0
    %88 = vmatpush1.msra.mxu0 %v50
    %89 = vmatprep.subr.mxu0 0.0
    %90 = vmatpush2.msra.mxu0 0.0
    %91 = vmatprep.subr.mxu0 0.0
    %92 = vmatpush2.msra.mxu0 0.0
    %93 = vmatprep.subr.mxu0 0.0
    %94 = vmatpush2.msra.mxu0 0.0
    %95 = vmatprep.subr.mxu0 0.0
    %96 = vmatpush2.msra.mxu0 0.0
    %97 = vmatprep.subr.mxu0 0.0
    %98 = vmatpush2.msra.mxu0 0.0
    %99 = vmatprep.subr.mxu0 0.0
    %100 = vmatpush2.msra.mxu0 0.0
    %101 = vmatprep.subr.mxu0 0.0
    %102 = vmatpush2.msra.mxu0 0.0
    %103 = vmatprep.subr.mxu0 0.0
    %104 = vmatpush2.msra.mxu0 0.0
    %105 = vmatprep.subr.mxu0 0.0
    %106 = vmatpush2.msra.mxu0 0.0
    %107 = vmatprep.subr.mxu0 0.0
    %108 = vmatpush2.msra.mxu0 0.0
    %109 = vmatprep.subr.mxu0 0.0
    %110 = vmatpush2.msra.mxu0 0.0
    %111 = vmatprep.subr.mxu0 0.0
    %112 = vmatpush2.msra.mxu0 0.0
    %113 = vmatprep.subr.mxu0 0.0
    %114 = vmatpush2.msra.mxu0 0.0
    %115 = vmatprep.subr.mxu0 0.0
    %116 = vmatpush2.msra.mxu0 0.0
    %117 = vmatprep.subr.mxu0 0.0
    %118 = vmatpush2.msra.mxu0 0.0
    %119 = vmatprep.subr.mxu0 0.0
    %120 = vmatpush2.msra.mxu0 0.0
    %121 = vmatprep.mubr.f32.mxu0 0.0
    %122 = vmatmul.mubr.f32.gmra.mxu0 %v53
    %v123 = vpop.f32.mrf.mxu0
    %v124 = vadd.f32 0.0, %v123
    %v125 = vpop.f32.mrf.mxu0
    %126 = vdwg.mxu0
    %128 = vset.pattern.permute.xlu0 0
    %129 = vperm.xlu0 %128, %v29
    %v130 = vpop.permute.xlu0 %129
    %v132 = vmul.f32 %v124, %v130
    %134 = vset.pattern.permute.xlu0 0
    %135 = vperm.xlu0 %134, %v30
    %v136 = vpop.permute.xlu0 %135
    %v138 = vadd.f32 %v132, %v136
    %v139 = vmax.f32 %v138, 0.0
    %141 = vrot.lane.b32.xlu0 %v139, 1
    %v142 = vpop.permute.xlu0 %141
    %v144 = vsel %vm38, 0.0, %v142
    %v145 = vsel %vm40, %v144, 0.0
    %v147 = vrot.slane %v145, 4
    %148 = vrot.lane.b32.xlu0 %v147, 127
    %v149 = vpop.permute.xlu0 %148
    %151 = vrot.lane.b32.xlu0 %v145, 126
    %v152 = vpop.permute.xlu0 %151
    %v153 = vsel %vm49, %v145, %v149
    %v155 = vsel %vm51, %v28, 0
    %v157 = vsel %vm49, %v152, 0
    %159 = vmatprep.subr.mxu0 0.0
    %160 = vmatpush1.msra.mxu0 0.0
    %161 = vmatprep.subr.mxu0 0.0
    %162 = vmatpush1.msra.mxu0 0.0
    %163 = vmatprep.subr.mxu0 0.0
    %164 = vmatpush1.msra.mxu0 0.0
    %165 = vmatprep.subr.mxu0 0.0
    %166 = vmatpush1.msra.mxu0 0.0
    %167 = vmatprep.subr.mxu0 0.0
    %168 = vmatpush1.msra.mxu0 0.0
    %169 = vmatprep.subr.mxu0 0.0
    %170 = vmatpush1.msra.mxu0 0.0
    %171 = vmatprep.subr.mxu0 0.0
    %172 = vmatpush1.msra.mxu0 0.0
    %173 = vmatprep.subr.mxu0 0.0
    %174 = vmatpush1.msra.mxu0 0.0
    %175 = vmatprep.subr.mxu0 0.0
    %176 = vmatpush1.msra.mxu0 0.0
    %177 = vmatprep.subr.mxu0 0.0
    %178 = vmatpush1.msra.mxu0 0.0
    %179 = vmatprep.subr.mxu0 0.0
    %180 = vmatpush1.msra.mxu0 0.0
    %181 = vmatprep.subr.mxu0 0.0
    %182 = vmatpush1.msra.mxu0 0.0
    %183 = vmatprep.subr.mxu0 0.0
    %184 = vmatpush1.msra.mxu0 0.0
    %185 = vmatprep.subr.mxu0 0.0
    %186 = vmatpush1.msra.mxu0 0.0
    %187 = vmatprep.subr.mxu0 0.0
    %188 = vmatpush1.msra.mxu0 %v157
    %189 = vmatprep.subr.mxu0 0.0
    %190 = vmatpush1.msra.mxu0 %v153
    %191 = vmatprep.subr.mxu0 0.0
    %192 = vmatpush2.msra.mxu0 0.0
    %193 = vmatprep.subr.mxu0 0.0
    %194 = vmatpush2.msra.mxu0 0.0
    %195 = vmatprep.subr.mxu0 0.0
    %196 = vmatpush2.msra.mxu0 0.0
    %197 = vmatprep.subr.mxu0 0.0
    %198 = vmatpush2.msra.mxu0 0.0
    %199 = vmatprep.subr.mxu0 0.0
    %200 = vmatpush2.msra.mxu0 0.0
    %201 = vmatprep.subr.mxu0 0.0
    %202 = vmatpush2.msra.mxu0 0.0
    %203 = vmatprep.subr.mxu0 0.0
    %204 = vmatpush2.msra.mxu0 0.0
    %205 = vmatprep.subr.mxu0 0.0
    %206 = vmatpush2.msra.mxu0 0.0
    %207 = vmatprep.subr.mxu0 0.0
    %208 = vmatpush2.msra.mxu0 0.0
    %209 = vmatprep.subr.mxu0 0.0
    %210 = vmatpush2.msra.mxu0 0.0
    %211 = vmatprep.subr.mxu0 0.0
    %212 = vmatpush2.msra.mxu0 0.0
    %213 = vmatprep.subr.mxu0 0.0
    %214 = vmatpush2.msra.mxu0 0.0
    %215 = vmatprep.subr.mxu0 0.0
    %216 = vmatpush2.msra.mxu0 0.0
    %217 = vmatprep.subr.mxu0 0.0
    %218 = vmatpush2.msra.mxu0 0.0
    %219 = vmatprep.subr.mxu0 0.0
    %220 = vmatpush2.msra.mxu0 0.0
    %221 = vmatprep.subr.mxu0 0.0
    %222 = vmatpush2.msra.mxu0 0.0
    %223 = vmatprep.mubr.f32.mxu0 0.0
    %224 = vmatmul.mubr.f32.gmra.mxu0 %v155
    %v225 = vpop.f32.mrf.mxu0
    %v226 = vadd.f32 0.0, %v225
    %v227 = vpop.f32.mrf.mxu0
    %228 = vdwg.mxu0
    %230 = vset.pattern.permute.xlu0 0
    %231 = vperm.xlu0 %230, %v31
    %v232 = vpop.permute.xlu0 %231
    %v234 = vmul.f32 %v226, %v232
    %236 = vset.pattern.permute.xlu0 0
    %237 = vperm.xlu0 %236, %v32
    %v238 = vpop.permute.xlu0 %237
    %v240 = vadd.f32 %v234, %v238
    %v241 = vmax.f32 %v240, 0.0
    %v242 = vadd.f32 %v241, %v33
    %v243 = vmax.f32 %v242, 0.0
    %v244 = vmin.f32 %v243, 6.0
    %vm245 = vcmask 125952
    %246 = vst.msk [vmem:[#allocation2] sm:$0xf] %vm245, %v244
    %s247 = scalar_lea.vmem %s0, 4
    %v248 = vld [vmem:[%s247] sm:$0xf]
    %250 = vrot.lane.b32.xlu0 %v248, 1
    %v251 = vpop.permute.xlu0 %250
    %v253 = vsel %vm38, 0.0, %v251
    %v254 = vsel %vm40, %v253, 0.0
    %v256 = vrot.slane %v254, 4
    %257 = vrot.lane.b32.xlu0 %v256, 127
    %v258 = vpop.permute.xlu0 %257
    %260 = vrot.lane.b32.xlu0 %v254, 126
    %v261 = vpop.permute.xlu0 %260
    %v262 = vsel %vm49, %v254, %v258
    %v263 = vsel %vm49, %v261, 0
    %265 = vmatprep.subr.mxu0 0.0
    %266 = vmatpush1.msra.mxu0 0.0
    %267 = vmatprep.subr.mxu0 0.0
    %268 = vmatpush1.msra.mxu0 0.0
    %269 = vmatprep.subr.mxu0 0.0
    %270 = vmatpush1.msra.mxu0 0.0
    %271 = vmatprep.subr.mxu0 0.0
    %272 = vmatpush1.msra.mxu0 0.0
    %273 = vmatprep.subr.mxu0 0.0
    %274 = vmatpush1.msra.mxu0 0.0
    %275 = vmatprep.subr.mxu0 0.0
    %276 = vmatpush1.msra.mxu0 0.0
    %277 = vmatprep.subr.mxu0 0.0
    %278 = vmatpush1.msra.mxu0 0.0
    %279 = vmatprep.subr.mxu0 0.0
    %280 = vmatpush1.msra.mxu0 0.0
    %281 = vmatprep.subr.mxu0 0.0
    %282 = vmatpush1.msra.mxu0 0.0
    %283 = vmatprep.subr.mxu0 0.0
    %284 = vmatpush1.msra.mxu0 0.0
    %285 = vmatprep.subr.mxu0 0.0
    %286 = vmatpush1.msra.mxu0 0.0
    %287 = vmatprep.subr.mxu0 0.0
    %288 = vmatpush1.msra.mxu0 0.0
    %289 = vmatprep.subr.mxu0 0.0
    %290 = vmatpush1.msra.mxu0 0.0
    %291 = vmatprep.subr.mxu0 0.0
    %292 = vmatpush1.msra.mxu0 0.0
    %293 = vmatprep.subr.mxu0 0.0
    %294 = vmatpush1.msra.mxu0 %v263
    %295 = vmatprep.subr.mxu0 0.0
    %296 = vmatpush1.msra.mxu0 %v262
    %297 = vmatprep.subr.mxu0 0.0
    %298 = vmatpush2.msra.mxu0 0.0
    %299 = vmatprep.subr.mxu0 0.0
    %300 = vmatpush2.msra.mxu0 0.0
    %301 = vmatprep.subr.mxu0 0.0
    %302 = vmatpush2.msra.mxu0 0.0
    %303 = vmatprep.subr.mxu0 0.0
    %304 = vmatpush2.msra.mxu0 0.0
    %305 = vmatprep.subr.mxu0 0.0
    %306 = vmatpush2.msra.mxu0 0.0
    %307 = vmatprep.subr.mxu0 0.0
    %308 = vmatpush2.msra.mxu0 0.0
    %309 = vmatprep.subr.mxu0 0.0
    %310 = vmatpush2.msra.mxu0 0.0
    %311 = vmatprep.subr.mxu0 0.0
    %312 = vmatpush2.msra.mxu0 0.0
    %313 = vmatprep.subr.mxu0 0.0
    %314 = vmatpush2.msra.mxu0 0.0
    %315 = vmatprep.subr.mxu0 0.0
    %316 = vmatpush2.msra.mxu0 0.0
    %317 = vmatprep.subr.mxu0 0.0
    %318 = vmatpush2.msra.mxu0 0.0
    %319 = vmatprep.subr.mxu0 0.0
    %320 = vmatpush2.msra.mxu0 0.0
    %321 = vmatprep.subr.mxu0 0.0
    %322 = vmatpush2.msra.mxu0 0.0
    %323 = vmatprep.subr.mxu0 0.0
    %324 = vmatpush2.msra.mxu0 0.0
    %325 = vmatprep.subr.mxu0 0.0
    %326 = vmatpush2.msra.mxu0 0.0
    %327 = vmatprep.subr.mxu0 0.0
    %328 = vmatpush2.msra.mxu0 0.0
    %329 = vmatprep.mubr.f32.mxu0 0.0
    %330 = vmatmul.mubr.f32.gmra.mxu0 %v53
    %v331 = vpop.f32.mrf.mxu0
    %v332 = vadd.f32 0.0, %v331
    %v333 = vpop.f32.mrf.mxu0
    %334 = vdwg.mxu0
    %v335 = vmul.f32 %v332, %v130
    %v336 = vadd.f32 %v335, %v136
    %v337 = vmax.f32 %v336, 0.0
    %339 = vrot.lane.b32.xlu0 %v337, 1
    %v340 = vpop.permute.xlu0 %339
    %v342 = vsel %vm38, 0.0, %v340
    %v343 = vsel %vm40, %v342, 0.0
    %v345 = vrot.slane %v343, 4
    %346 = vrot.lane.b32.xlu0 %v345, 127
    %v347 = vpop.permute.xlu0 %346
    %349 = vrot.lane.b32.xlu0 %v343, 126
    %v350 = vpop.permute.xlu0 %349
    %v351 = vsel %vm49, %v343, %v347
    %v352 = vsel %vm49, %v350, 0
    %354 = vmatprep.subr.mxu0 0.0
    %355 = vmatpush1.msra.mxu0 0.0
    %356 = vmatprep.subr.mxu0 0.0
    %357 = vmatpush1.msra.mxu0 0.0
    %358 = vmatprep.subr.mxu0 0.0
    %359 = vmatpush1.msra.mxu0 0.0
    %360 = vmatprep.subr.mxu0 0.0
    %361 = vmatpush1.msra.mxu0 0.0
    %362 = vmatprep.subr.mxu0 0.0
    %363 = vmatpush1.msra.mxu0 0.0
    %364 = vmatprep.subr.mxu0 0.0
    %365 = vmatpush1.msra.mxu0 0.0
    %366 = vmatprep.subr.mxu0 0.0
    %367 = vmatpush1.msra.mxu0 0.0
    %368 = vmatprep.subr.mxu0 0.0
    %369 = vmatpush1.msra.mxu0 0.0
    %370 = vmatprep.subr.mxu0 0.0
    %371 = vmatpush1.msra.mxu0 0.0
    %372 = vmatprep.subr.mxu0 0.0
    %373 = vmatpush1.msra.mxu0 0.0
    %374 = vmatprep.subr.mxu0 0.0
    %375 = vmatpush1.msra.mxu0 0.0
    %376 = vmatprep.subr.mxu0 0.0
    %377 = vmatpush1.msra.mxu0 0.0
    %378 = vmatprep.subr.mxu0 0.0
    %379 = vmatpush1.msra.mxu0 0.0
    %380 = vmatprep.subr.mxu0 0.0
    %381 = vmatpush1.msra.mxu0 0.0
    %382 = vmatprep.subr.mxu0 0.0
    %383 = vmatpush1.msra.mxu0 %v352
    %384 = vmatprep.subr.mxu0 0.0
    %385 = vmatpush1.msra.mxu0 %v351
    %386 = vmatprep.subr.mxu0 0.0
    %387 = vmatpush2.msra.mxu0 0.0
    %388 = vmatprep.subr.mxu0 0.0
    %389 = vmatpush2.msra.mxu0 0.0
    %390 = vmatprep.subr.mxu0 0.0
    %391 = vmatpush2.msra.mxu0 0.0
    %392 = vmatprep.subr.mxu0 0.0
    %393 = vmatpush2.msra.mxu0 0.0
    %394 = vmatprep.subr.mxu0 0.0
    %395 = vmatpush2.msra.mxu0 0.0
    %396 = vmatprep.subr.mxu0 0.0
    %397 = vmatpush2.msra.mxu0 0.0
    %398 = vmatprep.subr.mxu0 0.0
    %399 = vmatpush2.msra.mxu0 0.0
    %400 = vmatprep.subr.mxu0 0.0
    %401 = vmatpush2.msra.mxu0 0.0
    %402 = vmatprep.subr.mxu0 0.0
    %403 = vmatpush2.msra.mxu0 0.0
    %404 = vmatprep.subr.mxu0 0.0
    %405 = vmatpush2.msra.mxu0 0.0
    %406 = vmatprep.subr.mxu0 0.0
    %407 = vmatpush2.msra.mxu0 0.0
    %408 = vmatprep.subr.mxu0 0.0
    %409 = vmatpush2.msra.mxu0 0.0
    %410 = vmatprep.subr.mxu0 0.0
    %411 = vmatpush2.msra.mxu0 0.0
    %412 = vmatprep.subr.mxu0 0.0
    %413 = vmatpush2.msra.mxu0 0.0
    %414 = vmatprep.subr.mxu0 0.0
    %415 = vmatpush2.msra.mxu0 0.0
    %416 = vmatprep.subr.mxu0 0.0
    %417 = vmatpush2.msra.mxu0 0.0
    %418 = vmatprep.mubr.f32.mxu0 0.0
    %419 = vmatmul.mubr.f32.gmra.mxu0 %v155
    %v420 = vpop.f32.mrf.mxu0
    %v421 = vadd.f32 0.0, %v420
    %v422 = vpop.f32.mrf.mxu0
    %423 = vdwg.mxu0
    %v424 = vmul.f32 %v421, %v232
    %v425 = vadd.f32 %v424, %v238
    %v426 = vmax.f32 %v425, 0.0
    %v427 = vadd.f32 %v426, %v248
    %v428 = vmax.f32 %v427, 0.0
    %v429 = vmin.f32 %v428, 6.0
    %s430 = scalar_lea.vmem [#allocation2], 4
    %431 = vst.msk [vmem:[%s430] sm:$0xf] %vm245, %v429
    // Predicated region
    $region30: #{tpu_custom_call.1} parent=1 // pred_check
      _
    $region31: #{tpu_custom_call.1} parent=1 // pred_check_branch
      %433 = sbr.rel (0) target = $region33
    $region32: #{tpu_custom_call.1} parent=1 // pred_region
      %s435 = ssub.s32 128, 128
      %436 = vsyncadd [#allocation3], %s435
      %s437 = sshll.u32 [#allocation2], 4
      %s438 = int_to_ptr.vmem [resolvable:$true] %s437
      %443 = dma.vmem_to_hbm [thread:$0]  %s438, 128, %s7, [#allocation3], 64, 64, 4
    $region33: #{tpu_custom_call.1} parent=1 // pred_fallthru
      _
    // Predicated region
    $region34: #{tpu_custom_call.1} parent=1 // pred_check
      _
    $region35: #{tpu_custom_call.1} parent=1 // pred_check_branch
      %445 = sbr.rel (0) target = $region37
    $region36: #{tpu_custom_call.1} parent=1 // pred_region
      %446 = dma.done [#allocation3], 128
    $region37: #{tpu_custom_call.1} parent=1 // pred_fallthru
      _
    %447 = vsyncpa [#allocation3], 1

</llo_original>
